<compile_context>
chip_gen: v5e
topology: v5e:2x2
jax: 0.10.0
libtpu: 0.0.40
codegen_flags: <defaults>
</compile_context>

<pallas_src>
import functools

import jax
import jax.numpy as jnp
from jax.experimental import pallas as pl
from jax.experimental.pallas import tpu as pltpu


# ---------------------------------------------------------------------------
# Kernels
# ---------------------------------------------------------------------------

def _se_fused_kernel(x_ref, w1t_ref, w2_ref, o_ref, *, inv_hw):
    """Fused squeeze-excite-scale for one (BB, C, HW) channels-first block.

    x_ref  : (BB, C, HW) input dtype; C on sublanes, HW on lanes
    w1t_ref: (C, C_red)  first 1x1-conv weight, pre-transposed
    w2_ref : (C, C_red)  second 1x1-conv weight (native layout)
    """
    x = x_ref[...]
    # Squeeze: per-image global average pool over HW (lane/XLU reduce), f32 acc.
    pooled = jnp.sum(x, axis=2, dtype=jnp.float32, keepdims=True) * inv_hw  # (BB,C,1)

    # Excite: two tiny bias-free FCs on VPU + cross-lane reductions
    # (no N=1 MXU matmuls on the per-image critical path).
    w1t = w1t_ref[...].astype(jnp.float32)[None]        # (1, C, C_red)
    w2 = w2_ref[...].astype(jnp.float32)[None]          # (1, C, C_red)
    h = jnp.sum(w1t * pooled, axis=1, keepdims=True)    # (BB, 1, C_red)  sublane reduce
    h = jnp.maximum(h, 0.0)
    y = jnp.sum(w2 * h, axis=2, keepdims=True)          # (BB, C, 1)      lane reduce
    gate = jax.nn.sigmoid(y)

    # Scale: per-channel (per-sublane) gate broadcast over the HW lanes.
    # Re-read x from the ref so the full slab is not held live across the gate
    # dependency.  Multiply in the input dtype (no f32 slab temporary).
    o_ref[...] = x_ref[...] * gate.astype(o_ref.dtype)


def _se_pool_kernel(x_ref, psum_ref):
    """Two-pass fallback, pass 0: accumulate per-image channel sums over HW tiles."""
    @pl.when(pl.program_id(1) == 0)
    def _():
        psum_ref[...] = jnp.zeros_like(psum_ref)
    psum_ref[...] += jnp.sum(x_ref[...], axis=2, dtype=jnp.float32, keepdims=True)


def _se_scale_kernel(x_ref, gate_ref, o_ref):
    """Two-pass fallback, pass 1: scale one HW tile with the per-channel gate."""
    o_ref[...] = x_ref[...] * gate_ref[...].astype(o_ref.dtype)


# ---------------------------------------------------------------------------
# Wrapper
# ---------------------------------------------------------------------------

def _vmem_budget_bytes():
    """Usable VMEM budget derived from the actual chip, minus scratch headroom."""
    cap = 64 * 1024 * 1024  # conservative default (v7x physical per-TC)
    try:
        info = pltpu.get_tpu_info()
        cap = int(getattr(info, "vmem_capacity_bytes", cap))
    except Exception:
        pass
    return max(16 * 1024 * 1024, cap - 8 * 1024 * 1024)


def se_layer(x_nchw, w1, w2, *, force_two_pass=False):
    """SE forward.  x_nchw: (B, C, H, W); w1: (C_red, C); w2: (C, C_red)."""
    B, C, H, W = x_nchw.shape
    HW = H * W
    # Channels-first kernel layout: (B, C, H, W) -> (B, C, HW) is a contiguous
    # view -- no host-side relayout of x at all.
    x = x_nchw.reshape(B, C, HW)
    w1t = jnp.transpose(w1)                         # (C, C_red): tiny, negligible
    itemsize = jnp.dtype(x_nchw.dtype).itemsize
    per_image_bytes = C * HW * itemsize
    weight_bytes = 2 * C * w1.shape[0] * jnp.dtype(w1.dtype).itemsize
    budget = _vmem_budget_bytes()
    headroom = weight_bytes + (1 << 20)

    # ---- choose images-per-block (amortize ~0.35us/step on small feature maps)
    bb = None
    if not force_two_pass:
        fits = [d for d in range(1, B + 1)
                if B % d == 0 and 4 * d * per_image_bytes + headroom <= budget]
        if fits:
            bb = next((d for d in fits if d * per_image_bytes >= (1 << 20)), fits[-1])

    if bb is not None:
        # ---------- single-pass fused path: x read once, written once ----------
        vmem_limit = int(min(budget,
                             max(32 << 20, 4 * bb * per_image_bytes + headroom + (1 << 20))))
        cost = pl.CostEstimate(
            flops=2 * B * HW * C + 4 * B * C * w1.shape[0],
            transcendentals=B * C,
            bytes_accessed=2 * B * HW * C * itemsize + weight_bytes)
        out = pl.pallas_call(
            functools.partial(_se_fused_kernel, inv_hw=1.0 / float(HW)),
            out_shape=jax.ShapeDtypeStruct((B, C, HW), x.dtype),
            grid_spec=pltpu.PrefetchScalarGridSpec(
                num_scalar_prefetch=0,
                grid=(B // bb,),
                in_specs=[
                    pl.BlockSpec((bb, C, HW), lambda b: (b, 0, 0)),
                    pl.BlockSpec(w1t.shape, lambda b: (0, 0)),
                    pl.BlockSpec(w2.shape, lambda b: (0, 0)),
                ],
                out_specs=pl.BlockSpec((bb, C, HW), lambda b: (b, 0, 0)),
            ),
            compiler_params=pltpu.CompilerParams(
                dimension_semantics=("parallel",),
                vmem_limit_bytes=vmem_limit),
            cost_estimate=cost,
        )(x, w1t, w2)
        return out.reshape(B, C, H, W)

    # ---------- two-pass HW-tiled fallback (large feature maps / small VMEM) ----
    # Largest 128-lane-aligned HW tile whose 4x-buffered blocks fit the budget.
    hw_tile = None
    for n in range(2, HW + 1):
        if HW % n:
            continue
        t = HW // n
        if t % 128:
            continue
        if 4 * C * t * itemsize + headroom <= budget:
            hw_tile = t
            break
    if hw_tile is None:
        hw_tile = HW  # best effort: untiled (compiler may reduce buffering)
    n_hw = HW // hw_tile
    vmem_limit = int(min(budget,
                         max(32 << 20, 4 * C * hw_tile * itemsize + headroom + (1 << 20))))

    # Pass 0: per-image channel sums accumulated across HW tiles (f32 accumulator
    # resident in VMEM via the constant output block index on the hw axis).
    psum = pl.pallas_call(
        _se_pool_kernel,
        out_shape=jax.ShapeDtypeStruct((B, C, 1), jnp.float32),
        grid_spec=pltpu.PrefetchScalarGridSpec(
            num_scalar_prefetch=0,
            grid=(B, n_hw),
            in_specs=[pl.BlockSpec((1, C, hw_tile), lambda b, h: (b, 0, h))],
            out_specs=pl.BlockSpec((1, C, 1), lambda b, h: (b, 0, 0)),
        ),
        compiler_params=pltpu.CompilerParams(
            dimension_semantics=("parallel", "arbitrary"),
            vmem_limit_bytes=vmem_limit),
    )(x)

    # Tiny excite in plain JAX (B x C, negligible next to the HBM sweeps).
    pooled = psum[..., 0] / float(HW)                                   # (B, C)
    h = jnp.maximum(pooled @ w1t.astype(jnp.float32), 0.0)              # (B, C_red)
    gate = jax.nn.sigmoid(h @ jnp.transpose(w2).astype(jnp.float32))    # (B, C)
    gate = gate.astype(x.dtype).reshape(B, C, 1)

    # Pass 1: scale each HW tile; both grid axes parallel (keeps both v7x TCs busy).
    out = pl.pallas_call(
        _se_scale_kernel,
        out_shape=jax.ShapeDtypeStruct((B, C, HW), x.dtype),
        grid_spec=pltpu.PrefetchScalarGridSpec(
            num_scalar_prefetch=0,
            grid=(B, n_hw),
            in_specs=[pl.BlockSpec((1, C, hw_tile), lambda b, h: (b, 0, h)),
                      pl.BlockSpec((1, C, 1), lambda b, h: (b, 0, 0))],
            out_specs=pl.BlockSpec((1, C, hw_tile), lambda b, h: (b, 0, h)),
        ),
        compiler_params=pltpu.CompilerParams(
            dimension_semantics=("parallel", "parallel"),
            vmem_limit_bytes=vmem_limit),
    )(x, gate)
    return out.reshape(B, C, H, W)


def se_layer_ref(x_nchw, w1, w2):
    """Pure-JAX reference (mirrors the PyTorch forward)."""
    xf = x_nchw.astype(jnp.float32)
    pooled = jnp.mean(xf, axis=(2, 3))                            # (B, C)
    h = jnp.maximum(pooled @ w1.T.astype(jnp.float32), 0.0)       # (B, C_red)
    y = jax.nn.sigmoid(h @ w2.T.astype(jnp.float32))              # (B, C)
    return (xf * y[:, :, None, None]).astype(x_nchw.dtype)


if __name__ == "__main__":
    key = jax.random.PRNGKey(0)
    kx, k1, k2, kx2 = jax.random.split(key, 4)

    # Small shapes consistent with the module (channel >= reduction).
    B, C, H, W = 2, 32, 16, 16
    reduction = 16
    C_red = C // reduction

    x = jax.random.normal(kx, (B, C, H, W), dtype=jnp.float32)
    w1 = jax.random.normal(k1, (C_red, C), dtype=jnp.float32) * 0.1
    w2 = jax.random.normal(k2, (C, C_red), dtype=jnp.float32) * 0.1

    # Single-pass fused path (batch-blocked).
    out = jax.block_until_ready(se_layer(x, w1, w2))
    ref = se_layer_ref(x, w1, w2)
    assert out.shape == (B, C, H, W)
    assert jnp.allclose(out, ref, atol=1e-5, rtol=1e-5), "mismatch vs reference"

    # Non-8/128-multiple spatial (7x7), B=1: masked lane reduce over HW.
    x2 = jax.random.normal(kx2, (1, C, 7, 7), dtype=jnp.float32)
    out2 = jax.block_until_ready(se_layer(x2, w1, w2))
    ref2 = se_layer_ref(x2, w1, w2)
    assert jnp.allclose(out2, ref2, atol=1e-5, rtol=1e-5), "mismatch (7x7)"

    # Exercise the two-pass HW-tiled fallback path at small shapes.
    out3 = jax.block_until_ready(se_layer(x, w1, w2, force_two_pass=True))
    assert jnp.allclose(out3, ref, atol=1e-5, rtol=1e-5), "mismatch (two-pass)"

    print("KERNEL_OK")
</pallas_src>

<mosaic_0001>
module attributes {stable_mosaic.version = 11 : i64} {
  func.func @_se_fused_kernel(%arg0: i32, %arg1: memref<2x32x256xf32, #tpu.memory_space<vmem>>, %arg2: memref<32x2xf32, #tpu.memory_space<vmem>>, %arg3: memref<32x2xf32, #tpu.memory_space<vmem>>, %arg4: memref<2x32x256xf32, #tpu.memory_space<vmem>>) attributes {dimension_semantics = [#tpu.dimension_semantics<parallel>], iteration_bounds = array<i64: 1>, scalar_prefetch = 0 : i64, scratch_operands = 0 : i64, tpu.core_type = #tpu.core_type<tc>, window_params = [{transform_indices = @transform_0, window_bounds = array<i64: 2, 32, 256>}, {pipeline_mode = #tpu.pipeline_mode<synchronous>, transform_indices = @transform_1, window_bounds = array<i64: 32, 2>}, {pipeline_mode = #tpu.pipeline_mode<synchronous>, transform_indices = @transform_2, window_bounds = array<i64: 32, 2>}, {transform_indices = @transform_3, window_bounds = array<i64: 2, 32, 256>}]} {
    %c0 = arith.constant 0 : index
    %c0_0 = arith.constant 0 : index
    %c0_1 = arith.constant 0 : index
    %0 = vector.load %arg1[%c0, %c0_0, %c0_1] : memref<2x32x256xf32, #tpu.memory_space<vmem>>, vector<2x32x256xf32>
    %cst = arith.constant dense<0.000000e+00> : vector<2x32xf32>
    %1 = vector.multi_reduction <add>, %0, %cst [2] : vector<2x32x256xf32> to vector<2x32xf32>
    %2 = vector.shape_cast %1 : vector<2x32xf32> to vector<2x32x1xf32>
    %cst_2 = arith.constant 3.906250e-03 : f32
    %3 = vector.broadcast %cst_2 : f32 to vector<2x32x1xf32>
    %4 = arith.mulf %2, %3 : vector<2x32x1xf32>
    %c0_3 = arith.constant 0 : index
    %c0_4 = arith.constant 0 : index
    %5 = vector.load %arg2[%c0_3, %c0_4] : memref<32x2xf32, #tpu.memory_space<vmem>>, vector<32x2xf32>
    %6 = vector.shape_cast %5 : vector<32x2xf32> to vector<1x32x2xf32>
    %c0_5 = arith.constant 0 : index
    %c0_6 = arith.constant 0 : index
    %7 = vector.load %arg3[%c0_5, %c0_6] : memref<32x2xf32, #tpu.memory_space<vmem>>, vector<32x2xf32>
    %8 = vector.shape_cast %7 : vector<32x2xf32> to vector<1x32x2xf32>
    %9 = vector.broadcast %6 : vector<1x32x2xf32> to vector<2x32x2xf32>
    %10 = vector.broadcast %4 : vector<2x32x1xf32> to vector<2x32x2xf32>
    %11 = arith.mulf %9, %10 : vector<2x32x2xf32>
    %cst_7 = arith.constant dense<0.000000e+00> : vector<2x2xf32>
    %12 = vector.multi_reduction <add>, %11, %cst_7 [1] : vector<2x32x2xf32> to vector<2x2xf32>
    %13 = vector.shape_cast %12 : vector<2x2xf32> to vector<2x1x2xf32>
    %cst_8 = arith.constant 0.000000e+00 : f32
    %14 = vector.broadcast %cst_8 : f32 to vector<2x1x2xf32>
    %15 = arith.maximumf %13, %14 : vector<2x1x2xf32>
    %16 = vector.broadcast %8 : vector<1x32x2xf32> to vector<2x32x2xf32>
    %17 = vector.broadcast %15 : vector<2x1x2xf32> to vector<2x32x2xf32>
    %18 = arith.mulf %16, %17 : vector<2x32x2xf32>
    %cst_9 = arith.constant dense<0.000000e+00> : vector<2x32xf32>
    %19 = vector.multi_reduction <add>, %18, %cst_9 [2] : vector<2x32x2xf32> to vector<2x32xf32>
    %20 = vector.shape_cast %19 : vector<2x32xf32> to vector<2x32x1xf32>
    %21 = arith.negf %20 : vector<2x32x1xf32>
    %22 = math.exp %21 : vector<2x32x1xf32>
    %cst_10 = arith.constant 1.000000e+00 : f32
    %23 = vector.broadcast %cst_10 : f32 to vector<2x32x1xf32>
    %24 = arith.addf %23, %22 : vector<2x32x1xf32>
    %25 = arith.divf %23, %24 : vector<2x32x1xf32>
    %c0_11 = arith.constant 0 : index
    %c0_12 = arith.constant 0 : index
    %c0_13 = arith.constant 0 : index
    %26 = vector.load %arg1[%c0_11, %c0_12, %c0_13] : memref<2x32x256xf32, #tpu.memory_space<vmem>>, vector<2x32x256xf32>
    %27 = vector.broadcast %25 : vector<2x32x1xf32> to vector<2x32x256xf32>
    %28 = arith.mulf %26, %27 : vector<2x32x256xf32>
    %c0_14 = arith.constant 0 : index
    %c0_15 = arith.constant 0 : index
    %c0_16 = arith.constant 0 : index
    %29 = vector.load %arg4[%c0_14, %c0_15, %c0_16] : memref<2x32x256xf32, #tpu.memory_space<vmem>>, vector<2x32x256xf32>
    tpu.vector_store %arg4[%c0_14, %c0_15, %c0_16], %28 {strides = array<i32>} : memref<2x32x256xf32, #tpu.memory_space<vmem>>, vector<2x32x256xf32>,
    return
  }
  func.func @transform_0(%arg0: i32) -> (i32, i32, i32) {
    %c0_i32 = arith.constant 0 : i32
    %c0_i32_0 = arith.constant 0 : i32
    %c0_i32_1 = arith.constant 0 : i32
    return %arg0, %c0_i32, %c0_i32_0 : i32, i32, i32
  }
  func.func @transform_1(%arg0: i32) -> (i32, i32) {
    %c0_i32 = arith.constant 0 : i32
    %c0_i32_0 = arith.constant 0 : i32
    %c0_i32_1 = arith.constant 0 : i32
    return %c0_i32, %c0_i32_0 : i32, i32
  }
  func.func @transform_2(%arg0: i32) -> (i32, i32) {
    %c0_i32 = arith.constant 0 : i32
    %c0_i32_0 = arith.constant 0 : i32
    %c0_i32_1 = arith.constant 0 : i32
    return %c0_i32, %c0_i32_0 : i32, i32
  }
  func.func @transform_3(%arg0: i32) -> (i32, i32, i32) {
    %c0_i32 = arith.constant 0 : i32
    %c0_i32_0 = arith.constant 0 : i32
    %c0_i32_1 = arith.constant 0 : i32
    return %arg0, %c0_i32, %c0_i32_0 : i32, i32, i32
  }
}

</mosaic_0001>

<llo_original>
// kernel: tpu_custom_call.1
$region0: #{tpu_custom_call.1}
  #allocation0 [shape = 'u32[]', space=smem, size = 0x4, offset = 0x4, fixed_abs, tag = 'smem constant byte address 0x4 - core index']
  #allocation1 [shape = 'u32[72,128]{1,0:T(1,128)}', space=vmem, size = 0x9000, scoped, tag = 'internal scratch']
  %s0 = inlined_call_operand.hbm [shape: f32[2,32,256], index: 0, kind: input, shape index: {}]
  %s1 = inlined_call_operand.vmem [shape: f32[32,2], index: 1, kind: input, shape index: {}]
  %s2 = inlined_call_operand.vmem [shape: f32[32,2], index: 2, kind: input, shape index: {}]
  %s3 = inlined_call_operand.hbm [shape: f32[2,32,256], index: 3, kind: output, shape index: {}]
  %s4 = sld [smem:[#allocation0]]
  $region26: #{tpu_custom_call.1} parent=0
    _
  %s6 = ssub.s32 1, %s4
  %s7 = scalar_select 0, %s6, %s4
  $region1: #{tpu_custom_call.1} parent=0
    #allocation2 [shape = 'u8[65536]{0}', space=vmem, size = 0x10000, scoped, tag = 'input window, operand 0, single buffered']
    #allocation3 [shape = 's32[1]{0}', space=sflag, size = 0x4, scoped, tag = 'scoped memory for tpu_custom_call.1']
    #allocation4 [shape = 's32[1]{0}', space=sflag, size = 0x4, scoped, tag = 'scoped memory for tpu_custom_call.1']
    #allocation5 [shape = 'u8[65536]{0}', space=vmem, size = 0x10000, scoped, tag = 'output window, operand 0, single buffered']
    %8 = vsyncpa [#allocation3], 0
    %9 = vsyncpa [#allocation4], 0
    // Predicated region
    $region2: #{tpu_custom_call.1} parent=1 // pred_check
      _
    $region3: #{tpu_custom_call.1} parent=1 // pred_check_branch
      %11 = sbr.rel (0) target = $region5
    $region4: #{tpu_custom_call.1} parent=1 // pred_region
      %13 = vsyncadd [#allocation3], 0
      %s14 = sshll.u32 %s0, 4
      %s15 = int_to_ptr.hbm [resolvable:$true] %s14
      %s16 = sshll.u32 [#allocation2], 4
      %s17 = int_to_ptr.vmem [resolvable:$true] %s16
      %22 = dma.hbm_to_vmem [thread:$0]  %s15, 2048, %s17, [#allocation3], 256, 256, 16
    $region5: #{tpu_custom_call.1} parent=1 // pred_fallthru
      _
    // Predicated region
    $region6: #{tpu_custom_call.1} parent=1 // pred_check
      _
    $region7: #{tpu_custom_call.1} parent=1 // pred_check_branch
      %24 = sbr.rel (0) target = $region9
    $region8: #{tpu_custom_call.1} parent=1 // pred_region
      _
    $region9: #{tpu_custom_call.1} parent=1 // pred_fallthru
      _
    // Predicated region
    $region10: #{tpu_custom_call.1} parent=1 // pred_check
      _
    $region11: #{tpu_custom_call.1} parent=1 // pred_check_branch
      %26 = sbr.rel (0) target = $region13
    $region12: #{tpu_custom_call.1} parent=1 // pred_region
      _
    $region13: #{tpu_custom_call.1} parent=1 // pred_fallthru
      _
    // Predicated region
    $region14: #{tpu_custom_call.1} parent=1 // pred_check
      _
    $region15: #{tpu_custom_call.1} parent=1 // pred_check_branch
      %28 = sbr.rel (0) target = $region17
    $region16: #{tpu_custom_call.1} parent=1 // pred_region
      %30 = dma.done [#allocation3], 2048
    $region17: #{tpu_custom_call.1} parent=1 // pred_fallthru
      _
    %v31 = vld [vmem:[#allocation2] sm:$0xff]
    %v32 = vld [vmem:[#allocation2 + $0x8] sm:$0xff]
    %v33 = vld [vmem:[#allocation2 + $0x10] sm:$0xff]
    %v34 = vld [vmem:[#allocation2 + $0x18] sm:$0xff]
    %v35 = vld [vmem:[#allocation2 + $0x20] sm:$0xff]
    %v36 = vld [vmem:[#allocation2 + $0x28] sm:$0xff]
    %v37 = vld [vmem:[#allocation2 + $0x30] sm:$0xff]
    %v38 = vld [vmem:[#allocation2 + $0x38] sm:$0xff]
    %v39 = vld [vmem:[#allocation2 + $0x40] sm:$0xff]
    %v40 = vld [vmem:[#allocation2 + $0x48] sm:$0xff]
    %v41 = vld [vmem:[#allocation2 + $0x50] sm:$0xff]
    %v42 = vld [vmem:[#allocation2 + $0x58] sm:$0xff]
    %v43 = vld [vmem:[#allocation2 + $0x60] sm:$0xff]
    %v44 = vld [vmem:[#allocation2 + $0x68] sm:$0xff]
    %v45 = vld [vmem:[#allocation2 + $0x70] sm:$0xff]
    %v46 = vld [vmem:[#allocation2 + $0x78] sm:$0xff]
    %v47 = vadd.f32 %v31, %v32
    %48 = vadd.xlane.f32.xlu0 %v47
    %v49 = vpop.xlane.xlu0 %48
    %v50 = vadd.f32 %v33, %v34
    %51 = vadd.xlane.f32.xlu0 %v50
    %v52 = vpop.xlane.xlu0 %51
    %v53 = vadd.f32 %v35, %v36
    %54 = vadd.xlane.f32.xlu0 %v53
    %v55 = vpop.xlane.xlu0 %54
    %v56 = vadd.f32 %v37, %v38
    %57 = vadd.xlane.f32.xlu0 %v56
    %v58 = vpop.xlane.xlu0 %57
    %v59 = vadd.f32 %v39, %v40
    %60 = vadd.xlane.f32.xlu0 %v59
    %v61 = vpop.xlane.xlu0 %60
    %v62 = vadd.f32 %v41, %v42
    %63 = vadd.xlane.f32.xlu0 %v62
    %v64 = vpop.xlane.xlu0 %63
    %v65 = vadd.f32 %v43, %v44
    %66 = vadd.xlane.f32.xlu0 %v65
    %v67 = vpop.xlane.xlu0 %66
    %v68 = vadd.f32 %v45, %v46
    %69 = vadd.xlane.f32.xlu0 %v68
    %v70 = vpop.xlane.xlu0 %69
    %v71 = vmul.f32 %v49, 0.00390625
    %v72 = vmul.f32 %v52, 0.00390625
    %v73 = vmul.f32 %v55, 0.00390625
    %v74 = vmul.f32 %v58, 0.00390625
    %v75 = vmul.f32 %v61, 0.00390625
    %v76 = vmul.f32 %v64, 0.00390625
    %v77 = vmul.f32 %v67, 0.00390625
    %v78 = vmul.f32 %v70, 0.00390625
    %v79 = vld [vmem:[%s1] sm:$0xff]
    %v80 = vld [vmem:[%s1 + $0x8] sm:$0xff]
    %v81 = vld [vmem:[%s1 + $0x10] sm:$0xff]
    %v82 = vld [vmem:[%s1 + $0x18] sm:$0xff]
    %v83 = vld [vmem:[%s2] sm:$0xff]
    %v84 = vld [vmem:[%s2 + $0x8] sm:$0xff]
    %v85 = vld [vmem:[%s2 + $0x10] sm:$0xff]
    %v86 = vld [vmem:[%s2 + $0x18] sm:$0xff]
    %v87 = vmul.f32 %v79, %v71
    %v88 = vmul.f32 %v80, %v72
    %v89 = vmul.f32 %v81, %v73
    %v90 = vmul.f32 %v82, %v74
    %v91 = vmul.f32 %v79, %v75
    %v92 = vmul.f32 %v80, %v76
    %v93 = vmul.f32 %v81, %v77
    %v94 = vmul.f32 %v82, %v78
    %vm95 = vcmask 15360
    %v96 = vsel %vm95, %v87, 0.0
    %v97 = vsel %vm95, %v88, 0.0
    %v98 = vadd.f32 %v96, %v97
    %v99 = vsel %vm95, %v89, 0.0
    %v100 = vadd.f32 %v98, %v99
    %v101 = vsel %vm95, %v90, 0.0
    %v102 = vadd.f32 %v100, %v101
    %v103 = vrot.slane %v102, 4
    %v104 = vadd.f32 %v102, %v103
    %v105 = vrot.slane %v104, 2
    %v106 = vadd.f32 %v104, %v105
    %v107 = vrot.slane %v106, 1
    %v108 = vadd.f32 %v106, %v107
    %v109 = vsel %vm95, %v91, 0.0
    %v110 = vsel %vm95, %v92, 0.0
    %v111 = vadd.f32 %v109, %v110
    %v112 = vsel %vm95, %v93, 0.0
    %v113 = vadd.f32 %v111, %v112
    %v114 = vsel %vm95, %v94, 0.0
    %v115 = vadd.f32 %v113, %v114
    %v116 = vrot.slane %v115, 4
    %v117 = vadd.f32 %v115, %v116
    %v118 = vrot.slane %v117, 2
    %v119 = vadd.f32 %v117, %v118
    %v120 = vrot.slane %v119, 1
    %v121 = vadd.f32 %v119, %v120
    %v122 = vmax.f32 %v108, 0.0
    %v123 = vmax.f32 %v121, 0.0
    %v124 = vmul.f32 %v83, %v122
    %v125 = vmul.f32 %v84, %v122
    %v126 = vmul.f32 %v85, %v122
    %v127 = vmul.f32 %v86, %v122
    %v128 = vmul.f32 %v83, %v123
    %v129 = vmul.f32 %v84, %v123
    %v130 = vmul.f32 %v85, %v123
    %v131 = vmul.f32 %v86, %v123
    %v132 = vsel %vm95, %v124, 0.0
    %133 = vadd.xlane.f32.xlu0 %v132
    %v134 = vpop.xlane.xlu0 %133
    %v135 = vsel %vm95, %v125, 0.0
    %136 = vadd.xlane.f32.xlu0 %v135
    %v137 = vpop.xlane.xlu0 %136
    %v138 = vsel %vm95, %v126, 0.0
    %139 = vadd.xlane.f32.xlu0 %v138
    %v140 = vpop.xlane.xlu0 %139
    %v141 = vsel %vm95, %v127, 0.0
    %142 = vadd.xlane.f32.xlu0 %v141
    %v143 = vpop.xlane.xlu0 %142
    %v144 = vsel %vm95, %v128, 0.0
    %145 = vadd.xlane.f32.xlu0 %v144
    %v146 = vpop.xlane.xlu0 %145
    %v147 = vsel %vm95, %v129, 0.0
    %148 = vadd.xlane.f32.xlu0 %v147
    %v149 = vpop.xlane.xlu0 %148
    %v150 = vsel %vm95, %v130, 0.0
    %151 = vadd.xlane.f32.xlu0 %v150
    %v152 = vpop.xlane.xlu0 %151
    %v153 = vsel %vm95, %v131, 0.0
    %154 = vadd.xlane.f32.xlu0 %v153
    %v155 = vpop.xlane.xlu0 %154
    %v156 = vxor.u32 %v134, 2147483648
    %v157 = vxor.u32 %v137, 2147483648
    %v158 = vxor.u32 %v140, 2147483648
    %v159 = vxor.u32 %v143, 2147483648
    %v160 = vxor.u32 %v146, 2147483648
    %v161 = vxor.u32 %v149, 2147483648
    %v162 = vxor.u32 %v152, 2147483648
    %v163 = vxor.u32 %v155, 2147483648
    %v164 = vmul.f32 %v156, 1.442695
    %v165 = vpow.pop %v164
    %v166 = vmul.f32 %v157, 1.442695
    %v167 = vpow.pop %v166
    %v168 = vmul.f32 %v158, 1.442695
    %v169 = vpow.pop %v168
    %v170 = vmul.f32 %v159, 1.442695
    %v171 = vpow.pop %v170
    %v172 = vmul.f32 %v160, 1.442695
    %v173 = vpow.pop %v172
    %v174 = vmul.f32 %v161, 1.442695
    %v175 = vpow.pop %v174
    %v176 = vmul.f32 %v162, 1.442695
    %v177 = vpow.pop %v176
    %v178 = vmul.f32 %v163, 1.442695
    %v179 = vpow.pop %v178
    %v180 = vadd.f32 %v165, 1.0
    %v181 = vadd.f32 %v167, 1.0
    %v182 = vadd.f32 %v169, 1.0
    %v183 = vadd.f32 %v171, 1.0
    %v184 = vadd.f32 %v173, 1.0
    %v185 = vadd.f32 %v175, 1.0
    %v186 = vadd.f32 %v177, 1.0
    %v187 = vadd.f32 %v179, 1.0
    %v188 = vrcp.pop %v180
    %v189 = vmul.f32 %v180, %v188
    %v190 = vsub.f32 1.0, %v189
    %v191 = vmul.f32 %v188, %v190
    %v192 = vadd.f32 %v188, %v191
    %vm193 = vweird.f32 %v180
    %vm194 = vweird.f32 %v188
    %vm195 = vmor %vm193, %vm194
    %v196 = vsel %vm195, %v188, %v192
    %v197 = vand.u32 2147483647, %v180
    %vm198 = vcmp.eq.f32.partialorder %v197, 8.507059e+37
    %v199 = vand.u32 %v180, 2147483648
    %v200 = vor.u32 1.1754944e-38, %v199
    %v201 = vsel %vm198, %v200, %v196
    %v202 = vmul.f32 1.0, %v201
    %v203 = vrcp.pop %v181
    %v204 = vmul.f32 %v181, %v203
    %v205 = vsub.f32 1.0, %v204
    %v206 = vmul.f32 %v203, %v205
    %v207 = vadd.f32 %v203, %v206
    %vm208 = vweird.f32 %v181
    %vm209 = vweird.f32 %v203
    %vm210 = vmor %vm208, %vm209
    %v211 = vsel %vm210, %v203, %v207
    %v212 = vand.u32 2147483647, %v181
    %vm213 = vcmp.eq.f32.partialorder %v212, 8.507059e+37
    %v214 = vand.u32 %v181, 2147483648
    %v215 = vor.u32 1.1754944e-38, %v214
    %v216 = vsel %vm213, %v215, %v211
    %v217 = vmul.f32 1.0, %v216
    %v218 = vrcp.pop %v182
    %v219 = vmul.f32 %v182, %v218
    %v220 = vsub.f32 1.0, %v219
    %v221 = vmul.f32 %v218, %v220
    %v222 = vadd.f32 %v218, %v221
    %vm223 = vweird.f32 %v182
    %vm224 = vweird.f32 %v218
    %vm225 = vmor %vm223, %vm224
    %v226 = vsel %vm225, %v218, %v222
    %v227 = vand.u32 2147483647, %v182
    %vm228 = vcmp.eq.f32.partialorder %v227, 8.507059e+37
    %v229 = vand.u32 %v182, 2147483648
    %v230 = vor.u32 1.1754944e-38, %v229
    %v231 = vsel %vm228, %v230, %v226
    %v232 = vmul.f32 1.0, %v231
    %v233 = vrcp.pop %v183
    %v234 = vmul.f32 %v183, %v233
    %v235 = vsub.f32 1.0, %v234
    %v236 = vmul.f32 %v233, %v235
    %v237 = vadd.f32 %v233, %v236
    %vm238 = vweird.f32 %v183
    %vm239 = vweird.f32 %v233
    %vm240 = vmor %vm238, %vm239
    %v241 = vsel %vm240, %v233, %v237
    %v242 = vand.u32 2147483647, %v183
    %vm243 = vcmp.eq.f32.partialorder %v242, 8.507059e+37
    %v244 = vand.u32 %v183, 2147483648
    %v245 = vor.u32 1.1754944e-38, %v244
    %v246 = vsel %vm243, %v245, %v241
    %v247 = vmul.f32 1.0, %v246
    %v248 = vrcp.pop %v184
    %v249 = vmul.f32 %v184, %v248
    %v250 = vsub.f32 1.0, %v249
    %v251 = vmul.f32 %v248, %v250
    %v252 = vadd.f32 %v248, %v251
    %vm253 = vweird.f32 %v184
    %vm254 = vweird.f32 %v248
    %vm255 = vmor %vm253, %vm254
    %v256 = vsel %vm255, %v248, %v252
    %v257 = vand.u32 2147483647, %v184
    %vm258 = vcmp.eq.f32.partialorder %v257, 8.507059e+37
    %v259 = vand.u32 %v184, 2147483648
    %v260 = vor.u32 1.1754944e-38, %v259
    %v261 = vsel %vm258, %v260, %v256
    %v262 = vmul.f32 1.0, %v261
    %v263 = vrcp.pop %v185
    %v264 = vmul.f32 %v185, %v263
    %v265 = vsub.f32 1.0, %v264
    %v266 = vmul.f32 %v263, %v265
    %v267 = vadd.f32 %v263, %v266
    %vm268 = vweird.f32 %v185
    %vm269 = vweird.f32 %v263
    %vm270 = vmor %vm268, %vm269
    %v271 = vsel %vm270, %v263, %v267
    %v272 = vand.u32 2147483647, %v185
    %vm273 = vcmp.eq.f32.partialorder %v272, 8.507059e+37
    %v274 = vand.u32 %v185, 2147483648
    %v275 = vor.u32 1.1754944e-38, %v274
    %v276 = vsel %vm273, %v275, %v271
    %v277 = vmul.f32 1.0, %v276
    %v278 = vrcp.pop %v186
    %v279 = vmul.f32 %v186, %v278
    %v280 = vsub.f32 1.0, %v279
    %v281 = vmul.f32 %v278, %v280
    %v282 = vadd.f32 %v278, %v281
    %vm283 = vweird.f32 %v186
    %vm284 = vweird.f32 %v278
    %vm285 = vmor %vm283, %vm284
    %v286 = vsel %vm285, %v278, %v282
    %v287 = vand.u32 2147483647, %v186
    %vm288 = vcmp.eq.f32.partialorder %v287, 8.507059e+37
    %v289 = vand.u32 %v186, 2147483648
    %v290 = vor.u32 1.1754944e-38, %v289
    %v291 = vsel %vm288, %v290, %v286
    %v292 = vmul.f32 1.0, %v291
    %v293 = vrcp.pop %v187
    %v294 = vmul.f32 %v187, %v293
    %v295 = vsub.f32 1.0, %v294
    %v296 = vmul.f32 %v293, %v295
    %v297 = vadd.f32 %v293, %v296
    %vm298 = vweird.f32 %v187
    %vm299 = vweird.f32 %v293
    %vm300 = vmor %vm298, %vm299
    %v301 = vsel %vm300, %v293, %v297
    %v302 = vand.u32 2147483647, %v187
    %vm303 = vcmp.eq.f32.partialorder %v302, 8.507059e+37
    %v304 = vand.u32 %v187, 2147483648
    %v305 = vor.u32 1.1754944e-38, %v304
    %v306 = vsel %vm303, %v305, %v301
    %v307 = vmul.f32 1.0, %v306
    %v308 = vmul.f32 %v31, %v202
    %v309 = vmul.f32 %v32, %v202
    %v310 = vmul.f32 %v33, %v217
    %v311 = vmul.f32 %v34, %v217
    %v312 = vmul.f32 %v35, %v232
    %v313 = vmul.f32 %v36, %v232
    %v314 = vmul.f32 %v37, %v247
    %v315 = vmul.f32 %v38, %v247
    %v316 = vmul.f32 %v39, %v262
    %v317 = vmul.f32 %v40, %v262
    %v318 = vmul.f32 %v41, %v277
    %v319 = vmul.f32 %v42, %v277
    %v320 = vmul.f32 %v43, %v292
    %v321 = vmul.f32 %v44, %v292
    %v322 = vmul.f32 %v45, %v307
    %v323 = vmul.f32 %v46, %v307
    %324 = vst [vmem:[#allocation5] sm:$0xff] %v308
    %325 = vst [vmem:[#allocation5 + $0x8] sm:$0xff] %v309
    %326 = vst [vmem:[#allocation5 + $0x10] sm:$0xff] %v310
    %327 = vst [vmem:[#allocation5 + $0x18] sm:$0xff] %v311
    %328 = vst [vmem:[#allocation5 + $0x20] sm:$0xff] %v312
    %329 = vst [vmem:[#allocation5 + $0x28] sm:$0xff] %v313
    %330 = vst [vmem:[#allocation5 + $0x30] sm:$0xff] %v314
    %331 = vst [vmem:[#allocation5 + $0x38] sm:$0xff] %v315
    %332 = vst [vmem:[#allocation5 + $0x40] sm:$0xff] %v316
    %333 = vst [vmem:[#allocation5 + $0x48] sm:$0xff] %v317
    %334 = vst [vmem:[#allocation5 + $0x50] sm:$0xff] %v318
    %335 = vst [vmem:[#allocation5 + $0x58] sm:$0xff] %v319
    %336 = vst [vmem:[#allocation5 + $0x60] sm:$0xff] %v320
    %337 = vst [vmem:[#allocation5 + $0x68] sm:$0xff] %v321
    %338 = vst [vmem:[#allocation5 + $0x70] sm:$0xff] %v322
    %339 = vst [vmem:[#allocation5 + $0x78] sm:$0xff] %v323
    // Predicated region
    $region18: #{tpu_custom_call.1} parent=1 // pred_check
      _
    $region19: #{tpu_custom_call.1} parent=1 // pred_check_branch
      %341 = sbr.rel (0) target = $region21
    $region20: #{tpu_custom_call.1} parent=1 // pred_region
      %343 = vsyncadd [#allocation4], 0
      %s344 = sshll.u32 [#allocation5], 4
      %s345 = int_to_ptr.vmem [resolvable:$true] %s344
      %s346 = sshll.u32 %s3, 4
      %s347 = int_to_ptr.hbm [resolvable:$true] %s346
      %352 = dma.vmem_to_hbm [thread:$0]  %s345, 2048, %s347, [#allocation4], 256, 256, 16
    $region21: #{tpu_custom_call.1} parent=1 // pred_fallthru
      _
    // Predicated region
    $region22: #{tpu_custom_call.1} parent=1 // pred_check
      _
    $region23: #{tpu_custom_call.1} parent=1 // pred_check_branch
      %354 = sbr.rel (0) target = $region25
    $region24: #{tpu_custom_call.1} parent=1 // pred_region
      %356 = dma.done [#allocation4], 2048
    $region25: #{tpu_custom_call.1} parent=1 // pred_fallthru
      _
    %357 = vsyncpa [#allocation3], 1
    %358 = vsyncpa [#allocation4], 1

</llo_original>
